<compile_context>
chip_gen: v6e
topology: v6e:2x2x1
jax: 0.10.0
libtpu: 0.0.40
codegen_flags: <defaults>
</compile_context>

<pallas_src>
import jax
import jax.numpy as jnp
from jax.experimental import pallas as pl
from jax.experimental.pallas import tpu as pltpu

BN_EPS = 1e-5
LANE = 128


def _round_up(x, m):
    return ((x + m - 1) // m) * m


def _padded_tile_bytes(rows, cols, itemsize):
    """VMEM footprint of a 2-D tile after (sublane, lane) padding."""
    sub = 16 if itemsize == 2 else 8
    return _round_up(max(rows, 1), sub) * _round_up(max(cols, 1), LANE) * itemsize


def _pick_batch_tile(B, per_sample_bytes, vmem_budget_bytes):
    """Batch tile so the double-buffered feature tile stays inside the budget."""
    tb = max(1, vmem_budget_bytes // (2 * max(per_sample_bytes, 1)))
    if tb >= B:
        tb = B
    elif tb >= 8:
        tb = (tb // 8) * 8          # sublane-aligned partial-batch tiles
    else:
        tb = min(8, B)              # partial tiles must stay 8-aligned
    # Keep >= 2 grid steps when the batch allows it so both v7x TensorCores
    # receive work under dimension_semantics=("parallel",).
    cap = _round_up(pl.cdiv(B, 2), 8)
    if cap < B:
        tb = min(tb, cap)
    return max(1, tb)


def _vmem_limit_bytes(TB, C, HW, M, D1, D2, OUT_PAD, feat_itemsize, w_itemsize):
    """Explicit VMEM accounting: double-buffered streamed tiles + resident
    weights (counted double-buffered to be safe) + live intermediate values."""
    feat_db = 2 * TB * _padded_tile_bytes(C, HW, feat_itemsize)
    meta_db = 2 * _padded_tile_bytes(TB, M, 4)
    out_db = 2 * _padded_tile_bytes(TB, OUT_PAD, 4)
    weights = 2 * (_padded_tile_bytes(M, D1, w_itemsize)
                   + _padded_tile_bytes(1, D1, 4)
                   + _padded_tile_bytes(D1, D2, w_itemsize)
                   + _padded_tile_bytes(1, D2, 4)
                   + _padded_tile_bytes(C, OUT_PAD, w_itemsize)
                   + _padded_tile_bytes(D2, OUT_PAD, w_itemsize)
                   + _padded_tile_bytes(1, OUT_PAD, 4))
    live = TB * 4 * (_round_up(C, LANE) + _round_up(D1, LANE)
                     + _round_up(D2, LANE) + _round_up(OUT_PAD, LANE))
    total = feat_db + meta_db + out_db + weights + live
    # 8 MiB headroom for compiler scratch; clamp to a range safe on v5e/v6e/v7x.
    return int(min(max(total + (8 << 20), 16 << 20), 48 << 20))


def _pool_sum_f32(feat_ref, chunk=512):
    """Sum over the trailing HW (lane) axis -> (TB, C) f32 without
    materializing a full-tile f32 upcast when the feature stream is sub-32-bit."""
    if feat_ref.dtype == jnp.float32:
        return jnp.sum(feat_ref[...], axis=-1)
    hw = feat_ref.shape[-1]
    pooled = None
    for s in range(0, hw, chunk):
        e = min(s + chunk, hw)
        part = jnp.sum(feat_ref[:, :, s:e].astype(jnp.float32), axis=-1)
        pooled = part if pooled is None else pooled + part
    return pooled


def head_kernel(feat_ref, xmeta_ref, w1_ref, b1_ref, w2_ref, b2_ref,
                wfc_img_ref, wfc_meta_ref, bfc_ref, out_ref):
    # ---- AdaptiveAvgPool2d((1,1)): sum over HW; 1/HW pre-folded into wfc_img ----
    pooled = _pool_sum_f32(feat_ref)                              # (TB, C) f32

    # ---- meta MLP branch (BN folded into w/b on host; SiLU in-kernel) ----
    xm = xmeta_ref[...].astype(w1_ref.dtype)                      # (TB, M)
    h = jnp.dot(xm, w1_ref[...], preferred_element_type=jnp.float32) + b1_ref[...]
    h = h * jax.nn.sigmoid(h)                                     # SiLU
    # Dropout(p=0.3) in eval mode == identity
    h = jnp.dot(h.astype(w2_ref.dtype), w2_ref[...],
                preferred_element_type=jnp.float32) + b2_ref[...]
    h = h * jax.nn.sigmoid(h)                                     # SiLU -> (TB, D2)

    # ---- concat(pooled, h) @ Wfc + bfc, concat folded into split weights ----
    out = (jnp.dot(pooled.astype(wfc_img_ref.dtype), wfc_img_ref[...],
                   preferred_element_type=jnp.float32)
           + jnp.dot(h.astype(wfc_meta_ref.dtype), wfc_meta_ref[...],
                     preferred_element_type=jnp.float32)
           + bfc_ref[...])

    # ---- 5 eval-mode Dropout(0.5) passes averaged == a single myfc output ----
    out_ref[...] = out


def seresnext_face_conditions_head(feat_bchw, x_meta, params, *,
                                   weight_dtype=jnp.bfloat16,
                                   max_batch_tile=None,
                                   vmem_feat_budget_bytes=8 * 1024 * 1024):
    """feat_bchw: (B, C, H, W) trunk output, consumed in its native dtype and
    NCHW layout (no wrapper-side transpose/cast HBM pass). x_meta: (B, M)."""
    B, C, H, W = feat_bchw.shape
    HW = H * W
    M = x_meta.shape[-1]
    OUT = params["bfc"].shape[-1]
    OUT_PAD = _round_up(OUT, LANE)

    # Free reshape (contiguous collapse of H,W) — no HBM rewrite.
    feat = feat_bchw.reshape(B, C, HW)
    feat_itemsize = jnp.dtype(feat.dtype).itemsize

    # Fold BatchNorm1d (eval) into the meta Linear layers (in f32), then cast
    # the matmul weights to bf16 for the native MXU path; biases stay f32.
    s1 = params["g1"] * jax.lax.rsqrt(params["v1"] + BN_EPS)
    w1 = (params["w1"] * s1).astype(weight_dtype)
    b1 = (params["b1"] - params["m1"]) * s1 + params["be1"]
    s2 = params["g2"] * jax.lax.rsqrt(params["v2"] + BN_EPS)
    w2 = (params["w2"] * s2).astype(weight_dtype)
    b2 = (params["b2"] - params["m2"]) * s2 + params["be2"]

    # Fold the 1/HW pooling scale into wfc_img; pad OUT up to a lane-dense 128.
    pad = OUT_PAD - OUT
    wfc_img = jnp.pad(params["wfc_img"] / HW, ((0, 0), (0, pad))).astype(weight_dtype)
    wfc_meta = jnp.pad(params["wfc_meta"], ((0, 0), (0, pad))).astype(weight_dtype)
    bfc = jnp.pad(params["bfc"], ((0, 0), (0, pad)))

    D1 = w1.shape[-1]
    D2 = w2.shape[-1]
    w_itemsize = jnp.dtype(weight_dtype).itemsize

    per_sample = _padded_tile_bytes(C, HW, feat_itemsize)
    TB = _pick_batch_tile(B, per_sample, vmem_feat_budget_bytes)
    if max_batch_tile is not None:
        TB = max(1, min(TB, max_batch_tile))
        if TB < B and TB % 8 != 0:
            TB = min(B, _round_up(TB, 8))
    grid = (pl.cdiv(B, TB),)

    in_specs = [
        pl.BlockSpec((TB, C, HW), lambda i: (i, 0, 0)),       # feat tile per step
        pl.BlockSpec((TB, M), lambda i: (i, 0)),              # meta tile per step
        pl.BlockSpec((M, D1), lambda i: (0, 0)),              # resident weights
        pl.BlockSpec((1, D1), lambda i: (0, 0)),
        pl.BlockSpec((D1, D2), lambda i: (0, 0)),
        pl.BlockSpec((1, D2), lambda i: (0, 0)),
        pl.BlockSpec((C, OUT_PAD), lambda i: (0, 0)),
        pl.BlockSpec((D2, OUT_PAD), lambda i: (0, 0)),
        pl.BlockSpec((1, OUT_PAD), lambda i: (0, 0)),
    ]
    out_spec = pl.BlockSpec((TB, OUT_PAD), lambda i: (i, 0))

    weight_bytes = ((w1.size + w2.size + wfc_img.size + wfc_meta.size) * w_itemsize
                    + (b1.size + b2.size + bfc.size) * 4)
    cost = pl.CostEstimate(
        flops=int(2 * B * HW * C
                  + 2 * B * (M * D1 + D1 * D2 + C * OUT_PAD + D2 * OUT_PAD)),
        transcendentals=int(B * (D1 + D2)),
        bytes_accessed=int(feat.size * feat_itemsize
                           + x_meta.size * x_meta.dtype.itemsize
                           + weight_bytes
                           + B * OUT_PAD * 4),
    )

    vmem_limit = _vmem_limit_bytes(TB, C, HW, M, D1, D2, OUT_PAD,
                                   feat_itemsize, w_itemsize)

    out_padded = pl.pallas_call(
        head_kernel,
        out_shape=jax.ShapeDtypeStruct((B, OUT_PAD), jnp.float32),
        grid=grid,
        in_specs=in_specs,
        out_specs=out_spec,
        compiler_params=pltpu.CompilerParams(
            dimension_semantics=("parallel",),
            vmem_limit_bytes=vmem_limit),
        cost_estimate=cost,
    )(feat, x_meta, w1, b1, w2, b2, wfc_img, wfc_meta, bfc)

    return out_padded[:, :OUT]


def _reference(feat_bchw, x_meta, p):
    """Plain-JAX transcription of the PyTorch forward (eval mode), all f32."""
    feat = feat_bchw.astype(jnp.float32)
    pooled = jnp.mean(feat, axis=(2, 3))
    h = x_meta @ p["w1"] + p["b1"]
    h = (h - p["m1"]) * jax.lax.rsqrt(p["v1"] + BN_EPS) * p["g1"] + p["be1"]
    h = h * jax.nn.sigmoid(h)
    h = h @ p["w2"] + p["b2"]
    h = (h - p["m2"]) * jax.lax.rsqrt(p["v2"] + BN_EPS) * p["g2"] + p["be2"]
    h = h * jax.nn.sigmoid(h)
    x = jnp.concatenate([pooled, h], axis=1)
    wfc = jnp.concatenate([p["wfc_img"], p["wfc_meta"]], axis=0)
    return x @ wfc + p["bfc"]


if __name__ == "__main__":
    # Small shapes consistent with the module's head:
    #   trunk channels C=32, n_meta_features=8, n_meta_dim=[32, 16], out_dim=4,
    #   batch=16 (split into 2 grid steps to exercise the pipeline / megacore),
    #   spatial 8x8.
    B, C, H, W = 16, 32, 8, 8
    M, D1, D2, OUT = 8, 32, 16, 4

    key = jax.random.PRNGKey(0)
    ks = jax.random.split(key, 10)

    feat = jax.random.normal(ks[0], (B, C, H, W), jnp.float32)
    x_meta = jax.random.normal(ks[1], (B, M), jnp.float32)

    params = {
        "w1": jax.random.normal(ks[2], (M, D1), jnp.float32) * 0.1,
        "b1": jax.random.normal(ks[3], (1, D1), jnp.float32) * 0.1,
        "g1": jnp.ones((1, D1), jnp.float32) * 1.1,
        "be1": jnp.full((1, D1), 0.05, jnp.float32),
        "m1": jnp.full((1, D1), 0.02, jnp.float32),
        "v1": jnp.ones((1, D1), jnp.float32) * 0.9,
        "w2": jax.random.normal(ks[4], (D1, D2), jnp.float32) * 0.1,
        "b2": jax.random.normal(ks[5], (1, D2), jnp.float32) * 0.1,
        "g2": jnp.ones((1, D2), jnp.float32) * 0.95,
        "be2": jnp.full((1, D2), -0.03, jnp.float32),
        "m2": jnp.full((1, D2), 0.01, jnp.float32),
        "v2": jnp.ones((1, D2), jnp.float32) * 1.2,
        "wfc_img": jax.random.normal(ks[6], (C, OUT), jnp.float32) * 0.1,
        "wfc_meta": jax.random.normal(ks[7], (D2, OUT), jnp.float32) * 0.1,
        "bfc": jax.random.normal(ks[8], (1, OUT), jnp.float32) * 0.1,
    }

    out = jax.block_until_ready(
        seresnext_face_conditions_head(feat, x_meta, params))
    ref = jax.block_until_ready(_reference(feat, x_meta, params))

    assert out.shape == (B, OUT), out.shape
    # bf16 matmul weights/operands (inference precision) vs. an all-f32
    # reference: allow ~1-2% abs/rel slack.
    err = float(jnp.max(jnp.abs(out - ref)))
    assert jnp.allclose(out, ref, atol=2e-2, rtol=2e-2), err
    print("KERNEL_OK")
</pallas_src>

<mosaic_0001>
module attributes {stable_mosaic.version = 11 : i64} {
  func.func @head_kernel(%arg0: i32, %arg1: memref<8x32x64xf32, #tpu.memory_space<vmem>>, %arg2: memref<8x8xf32, #tpu.memory_space<vmem>>, %arg3: memref<8x32xbf16, #tpu.memory_space<vmem>>, %arg4: memref<1x32xf32, #tpu.memory_space<vmem>>, %arg5: memref<32x16xbf16, #tpu.memory_space<vmem>>, %arg6: memref<1x16xf32, #tpu.memory_space<vmem>>, %arg7: memref<32x128xbf16, #tpu.memory_space<vmem>>, %arg8: memref<16x128xbf16, #tpu.memory_space<vmem>>, %arg9: memref<1x128xf32, #tpu.memory_space<vmem>>, %arg10: memref<8x128xf32, #tpu.memory_space<vmem>>) attributes {dimension_semantics = [#tpu.dimension_semantics<parallel>], iteration_bounds = array<i64: 2>, scalar_prefetch = 0 : i64, scratch_operands = 0 : i64, tpu.core_type = #tpu.core_type<tc>, window_params = [{transform_indices = @transform_0, window_bounds = array<i64: 8, 32, 64>}, {transform_indices = @transform_1, window_bounds = array<i64: 8, 8>}, {pipeline_mode = #tpu.pipeline_mode<synchronous>, transform_indices = @transform_2, window_bounds = array<i64: 8, 32>}, {pipeline_mode = #tpu.pipeline_mode<synchronous>, transform_indices = @transform_3, window_bounds = array<i64: 1, 32>}, {pipeline_mode = #tpu.pipeline_mode<synchronous>, transform_indices = @transform_4, window_bounds = array<i64: 32, 16>}, {pipeline_mode = #tpu.pipeline_mode<synchronous>, transform_indices = @transform_5, window_bounds = array<i64: 1, 16>}, {pipeline_mode = #tpu.pipeline_mode<synchronous>, transform_indices = @transform_6, window_bounds = array<i64: 32, 128>}, {pipeline_mode = #tpu.pipeline_mode<synchronous>, transform_indices = @transform_7, window_bounds = array<i64: 16, 128>}, {pipeline_mode = #tpu.pipeline_mode<synchronous>, transform_indices = @transform_8, window_bounds = array<i64: 1, 128>}, {transform_indices = @transform_9, window_bounds = array<i64: 8, 128>}]} {
    %c0 = arith.constant 0 : index
    %c0_0 = arith.constant 0 : index
    %c0_1 = arith.constant 0 : index
    %0 = vector.load %arg1[%c0, %c0_0, %c0_1] : memref<8x32x64xf32, #tpu.memory_space<vmem>>, vector<8x32x64xf32>
    %cst = arith.constant dense<0.000000e+00> : vector<8x32xf32>
    %1 = vector.multi_reduction <add>, %0, %cst [2] : vector<8x32x64xf32> to vector<8x32xf32>
    %c0_2 = arith.constant 0 : index
    %c0_3 = arith.constant 0 : index
    %2 = vector.load %arg2[%c0_2, %c0_3] : memref<8x8xf32, #tpu.memory_space<vmem>>, vector<8x8xf32>
    %3 = arith.truncf %2 : vector<8x8xf32> to vector<8x8xbf16>
    %c0_4 = arith.constant 0 : index
    %c0_5 = arith.constant 0 : index
    %4 = vector.load %arg3[%c0_4, %c0_5] : memref<8x32xbf16, #tpu.memory_space<vmem>>, vector<8x32xbf16>
    %cst_6 = arith.constant dense<0.000000e+00> : vector<8x32xf32>
    %5 = tpu.matmul %3, %4, %cst_6 {dimension_numbers = #tpu.dot_dimension_numbers<[1], [0], [0], [1], [0, 0, 1, 1], [], []>} : vector<8x8xbf16>, vector<8x32xbf16>, vector<8x32xf32> -> vector<8x32xf32>
    %c0_7 = arith.constant 0 : index
    %c0_8 = arith.constant 0 : index
    %6 = vector.load %arg4[%c0_7, %c0_8] : memref<1x32xf32, #tpu.memory_space<vmem>>, vector<1x32xf32>
    %7 = vector.broadcast %6 : vector<1x32xf32> to vector<8x32xf32>
    %8 = arith.addf %5, %7 : vector<8x32xf32>
    %9 = arith.negf %8 : vector<8x32xf32>
    %10 = math.exp %9 : vector<8x32xf32>
    %cst_9 = arith.constant 1.000000e+00 : f32
    %11 = vector.broadcast %cst_9 : f32 to vector<8x32xf32>
    %12 = arith.addf %11, %10 : vector<8x32xf32>
    %13 = arith.divf %11, %12 : vector<8x32xf32>
    %14 = arith.mulf %8, %13 : vector<8x32xf32>
    %15 = arith.truncf %14 : vector<8x32xf32> to vector<8x32xbf16>
    %c0_10 = arith.constant 0 : index
    %c0_11 = arith.constant 0 : index
    %16 = vector.load %arg5[%c0_10, %c0_11] : memref<32x16xbf16, #tpu.memory_space<vmem>>, vector<32x16xbf16>
    %cst_12 = arith.constant dense<0.000000e+00> : vector<8x16xf32>
    %17 = tpu.matmul %15, %16, %cst_12 {dimension_numbers = #tpu.dot_dimension_numbers<[1], [0], [0], [1], [0, 0, 1, 1], [], []>} : vector<8x32xbf16>, vector<32x16xbf16>, vector<8x16xf32> -> vector<8x16xf32>
    %c0_13 = arith.constant 0 : index
    %c0_14 = arith.constant 0 : index
    %18 = vector.load %arg6[%c0_13, %c0_14] : memref<1x16xf32, #tpu.memory_space<vmem>>, vector<1x16xf32>
    %19 = vector.broadcast %18 : vector<1x16xf32> to vector<8x16xf32>
    %20 = arith.addf %17, %19 : vector<8x16xf32>
    %21 = arith.negf %20 : vector<8x16xf32>
    %22 = math.exp %21 : vector<8x16xf32>
    %cst_15 = arith.constant 1.000000e+00 : f32
    %23 = vector.broadcast %cst_15 : f32 to vector<8x16xf32>
    %24 = arith.addf %23, %22 : vector<8x16xf32>
    %25 = arith.divf %23, %24 : vector<8x16xf32>
    %26 = arith.mulf %20, %25 : vector<8x16xf32>
    %27 = arith.truncf %1 : vector<8x32xf32> to vector<8x32xbf16>
    %c0_16 = arith.constant 0 : index
    %c0_17 = arith.constant 0 : index
    %28 = vector.load %arg7[%c0_16, %c0_17] : memref<32x128xbf16, #tpu.memory_space<vmem>>, vector<32x128xbf16>
    %cst_18 = arith.constant dense<0.000000e+00> : vector<8x128xf32>
    %29 = tpu.matmul %27, %28, %cst_18 {dimension_numbers = #tpu.dot_dimension_numbers<[1], [0], [0], [1], [0, 0, 1, 1], [], []>} : vector<8x32xbf16>, vector<32x128xbf16>, vector<8x128xf32> -> vector<8x128xf32>
    %30 = arith.truncf %26 : vector<8x16xf32> to vector<8x16xbf16>
    %c0_19 = arith.constant 0 : index
    %c0_20 = arith.constant 0 : index
    %31 = vector.load %arg8[%c0_19, %c0_20] : memref<16x128xbf16, #tpu.memory_space<vmem>>, vector<16x128xbf16>
    %cst_21 = arith.constant dense<0.000000e+00> : vector<8x128xf32>
    %32 = tpu.matmul %30, %31, %cst_21 {dimension_numbers = #tpu.dot_dimension_numbers<[1], [0], [0], [1], [0, 0, 1, 1], [], []>} : vector<8x16xbf16>, vector<16x128xbf16>, vector<8x128xf32> -> vector<8x128xf32>
    %33 = arith.addf %29, %32 : vector<8x128xf32>
    %c0_22 = arith.constant 0 : index
    %c0_23 = arith.constant 0 : index
    %34 = vector.load %arg9[%c0_22, %c0_23] : memref<1x128xf32, #tpu.memory_space<vmem>>, vector<1x128xf32>
    %35 = vector.broadcast %34 : vector<1x128xf32> to vector<8x128xf32>
    %36 = arith.addf %33, %35 : vector<8x128xf32>
    %c0_24 = arith.constant 0 : index
    %c0_25 = arith.constant 0 : index
    %37 = vector.load %arg10[%c0_24, %c0_25] : memref<8x128xf32, #tpu.memory_space<vmem>>, vector<8x128xf32>
    tpu.vector_store %arg10[%c0_24, %c0_25], %36 {strides = array<i32>} : memref<8x128xf32, #tpu.memory_space<vmem>>, vector<8x128xf32>,
    return
  }
  func.func @transform_0(%arg0: i32) -> (i32, i32, i32) {
    %c0_i32 = arith.constant 0 : i32
    %c0_i32_0 = arith.constant 0 : i32
    %c0_i32_1 = arith.constant 0 : i32
    return %arg0, %c0_i32, %c0_i32_0 : i32, i32, i32
  }
  func.func @transform_1(%arg0: i32) -> (i32, i32) {
    %c0_i32 = arith.constant 0 : i32
    %c0_i32_0 = arith.constant 0 : i32
    return %arg0, %c0_i32 : i32, i32
  }
  func.func @transform_2(%arg0: i32) -> (i32, i32) {
    %c0_i32 = arith.constant 0 : i32
    %c0_i32_0 = arith.constant 0 : i32
    %c0_i32_1 = arith.constant 0 : i32
    return %c0_i32, %c0_i32_0 : i32, i32
  }
  func.func @transform_3(%arg0: i32) -> (i32, i32) {
    %c0_i32 = arith.constant 0 : i32
    %c0_i32_0 = arith.constant 0 : i32
    %c0_i32_1 = arith.constant 0 : i32
    return %c0_i32, %c0_i32_0 : i32, i32
  }
  func.func @transform_4(%arg0: i32) -> (i32, i32) {
    %c0_i32 = arith.constant 0 : i32
    %c0_i32_0 = arith.constant 0 : i32
    %c0_i32_1 = arith.constant 0 : i32
    return %c0_i32, %c0_i32_0 : i32, i32
  }
  func.func @transform_5(%arg0: i32) -> (i32, i32) {
    %c0_i32 = arith.constant 0 : i32
    %c0_i32_0 = arith.constant 0 : i32
    %c0_i32_1 = arith.constant 0 : i32
    return %c0_i32, %c0_i32_0 : i32, i32
  }
  func.func @transform_6(%arg0: i32) -> (i32, i32) {
    %c0_i32 = arith.constant 0 : i32
    %c0_i32_0 = arith.constant 0 : i32
    %c0_i32_1 = arith.constant 0 : i32
    return %c0_i32, %c0_i32_0 : i32, i32
  }
  func.func @transform_7(%arg0: i32) -> (i32, i32) {
    %c0_i32 = arith.constant 0 : i32
    %c0_i32_0 = arith.constant 0 : i32
    %c0_i32_1 = arith.constant 0 : i32
    return %c0_i32, %c0_i32_0 : i32, i32
  }
  func.func @transform_8(%arg0: i32) -> (i32, i32) {
    %c0_i32 = arith.constant 0 : i32
    %c0_i32_0 = arith.constant 0 : i32
    %c0_i32_1 = arith.constant 0 : i32
    return %c0_i32, %c0_i32_0 : i32, i32
  }
  func.func @transform_9(%arg0: i32) -> (i32, i32) {
    %c0_i32 = arith.constant 0 : i32
    %c0_i32_0 = arith.constant 0 : i32
    return %arg0, %c0_i32 : i32, i32
  }
}

</mosaic_0001>

<llo_original>
// kernel: tpu_custom_call.1
$region0: #{tpu_custom_call.1}
  #allocation0 [shape = 'u32[]', space=smem, size = 0x4, offset = 0x4, fixed_abs, tag = 'smem constant byte address 0x4 - core index']
  #allocation1 [shape = 'u32[144,128]{1,0:T(1,128)}', space=vmem, size = 0x12000, scoped, tag = 'internal scratch']
  %s0 = inlined_call_operand.hbm [shape: f32[16,32,64], index: 0, kind: input, shape index: {}]
  %s1 = inlined_call_operand.vmem [shape: f32[16,8], index: 1, kind: input, shape index: {}]
  %s2 = inlined_call_operand.vmem [shape: bf16[8,32], index: 2, kind: input, shape index: {}]
  %s3 = inlined_call_operand.vmem [shape: f32[1,32], index: 3, kind: input, shape index: {}]
  %s4 = inlined_call_operand.vmem [shape: bf16[32,16], index: 4, kind: input, shape index: {}]
  %s5 = inlined_call_operand.vmem [shape: f32[1,16], index: 5, kind: input, shape index: {}]
  %s6 = inlined_call_operand.vmem [shape: bf16[32,128], index: 6, kind: input, shape index: {}]
  %s7 = inlined_call_operand.vmem [shape: bf16[16,128], index: 7, kind: input, shape index: {}]
  %s8 = inlined_call_operand.vmem [shape: f32[1,128], index: 8, kind: input, shape index: {}]
  %s9 = inlined_call_operand.hbm [shape: f32[16,128], index: 9, kind: output, shape index: {}]
  %s10 = sld [smem:[#allocation0]]
  $region73: #{tpu_custom_call.1} parent=0
    _
  %s12 = ssub.s32 1, %s10
  %s13 = scalar_select 0, %s12, %s10
  $region1: #{tpu_custom_call.1} parent=0
    #allocation2 [shape = 'u8[262144]{0}', space=vmem, size = 0x40000, scoped, tag = 'input window, operand 0']
    #allocation3 [shape = 's32[2]{0}', space=sflag, size = 0x8, scoped, tag = 'scoped memory for tpu_custom_call.1']
    #allocation4 [shape = 's32[2]{0}', space=sflag, size = 0x8, scoped, tag = 'scoped memory for tpu_custom_call.1']
    #allocation5 [shape = 'u8[8192]{0}', space=vmem, size = 0x2000, scoped, tag = 'output window, operand 0']
    %14 = vsyncpa [#allocation3], 0
    %s15 = scalar_lea.sflag [#allocation3], 1
    %16 = vsyncpa %s15, 0
    %17 = vsyncpa [#allocation4], 0
    %s18 = scalar_lea.sflag [#allocation4], 1
    %19 = vsyncpa %s18, 0
    loop: start=0, step=1, limit=4
    $region2: #{tpu_custom_call.1} parent=1 // loop_pre_header
      _
    $region3: #{tpu_custom_call.1} parent=1 // loop_header
      %s21 = sphi 0, %s25
      %p22 = scmp.ge.s32.totalorder %s21, 4
      %s31 = sphi 0, %s33
      %s34 = sphi 0, %s31
      %s35 = sphi 0, %s34
      %s51 = sphi 0, %s35
      %s57 = sphi 0, %s59
      %s60 = sphi 0, %s57
      %s61 = sphi 0, %s60
      %s77 = sphi 0, %s61
      %s81 = sphi 0, %s81
      %s83 = sphi 0, %s81
      %s84 = sphi 0, %s83
      %s98 = sphi 0, %s84
      %s102 = sphi 0, %s102
      %s104 = sphi 0, %s102
      %s105 = sphi 0, %s104
      %s119 = sphi 0, %s105
      %s123 = sphi 0, %s123
      %s125 = sphi 0, %s123
      %s126 = sphi 0, %s125
      %s140 = sphi 0, %s126
      %s144 = sphi 0, %s144
      %s146 = sphi 0, %s144
      %s147 = sphi 0, %s146
      %s161 = sphi 0, %s147
      %s165 = sphi 0, %s165
      %s167 = sphi 0, %s165
      %s168 = sphi 0, %s167
      %s182 = sphi 0, %s168
      %s186 = sphi 0, %s186
      %s188 = sphi 0, %s186
      %s189 = sphi 0, %s188
      %s203 = sphi 0, %s189
      %s207 = sphi 0, %s207
      %s209 = sphi 0, %s207
      %s210 = sphi 0, %s209
      %s224 = sphi 0, %s210
      %s230 = sphi 0, %s232
      %s233 = sphi 0, %s230
      %s234 = sphi 0, %s233
      %s250 = sphi 0, %s234
    $region4: #{tpu_custom_call.1} parent=1 // loop_header_branch
      %24 = sbr.rel (%p22) target = $region8
    $region5: #{tpu_custom_call.1} parent=1 // loop_body
      %s26 = ssub.s32 %s21, 1
      %s27 = ssub.s32 %s21, 2
      %s28 = sadd.s32 %s21, 1
      %s29 = ssub.s32 %s21, %s28
      %p30 = scmp.eq.s32.totalorder %s29, 0
      %s32 = sadd.s32 %s31, 1
      %s33 = scalar_select %p30, %s31, %s32
      %p36 = pneg %p30
      %p37 = scmp.eq.s32.totalorder %s21, 1
      %p38 = por %p36, %p37
      %p39 = scmp.ne.s32.totalorder %s31, %s34
      %p40 = scmp.eq.s32.totalorder %s21, 0
      %p41 = por %p39, %p40
      %p42 = scmp.ne.s32.totalorder %s31, %s34
      %p43 = scmp.eq.s32.totalorder %s26, 1
      %p44 = por %p42, %p43
      %p45 = scmp.ne.s32.totalorder %s34, %s35
      %p46 = scmp.eq.s32.totalorder %s26, 0
      %p47 = por %p45, %p46
      %p48 = scmp.ne.s32.totalorder %s34, %s35
      %p49 = scmp.eq.s32.totalorder %s27, 1
      %p50 = por %p48, %p49
      %p52 = scmp.ne.s32.totalorder %s35, %s51
      %p53 = scmp.eq.s32.totalorder %s27, 0
      %p54 = por %p52, %p53
      %s55 = ssub.s32 %s21, %s28
      %p56 = scmp.eq.s32.totalorder %s55, 0
      %s58 = sadd.s32 %s57, 1
      %s59 = scalar_select %p56, %s57, %s58
      %p62 = pneg %p56
      %p63 = scmp.eq.s32.totalorder %s21, 1
      %p64 = por %p62, %p63
      %p65 = scmp.ne.s32.totalorder %s57, %s60
      %p66 = scmp.eq.s32.totalorder %s21, 0
      %p67 = por %p65, %p66
      %p68 = scmp.ne.s32.totalorder %s57, %s60
      %p69 = scmp.eq.s32.totalorder %s26, 1
      %p70 = por %p68, %p69
      %p71 = scmp.ne.s32.totalorder %s60, %s61
      %p72 = scmp.eq.s32.totalorder %s26, 0
      %p73 = por %p71, %p72
      %p74 = scmp.ne.s32.totalorder %s60, %s61
      %p75 = scmp.eq.s32.totalorder %s27, 1
      %p76 = por %p74, %p75
      %p78 = scmp.ne.s32.totalorder %s61, %s77
      %p79 = scmp.eq.s32.totalorder %s27, 0
      %p80 = por %p78, %p79
      %s82 = sadd.s32 %s81, 1
      %p85 = scmp.eq.s32.totalorder %s21, 1
      %p86 = scmp.ne.s32.totalorder %s81, %s83
      %p87 = scmp.eq.s32.totalorder %s21, 0
      %p88 = por %p86, %p87
      %p89 = scmp.ne.s32.totalorder %s81, %s83
      %p90 = scmp.eq.s32.totalorder %s26, 1
      %p91 = por %p89, %p90
      %p92 = scmp.ne.s32.totalorder %s83, %s84
      %p93 = scmp.eq.s32.totalorder %s26, 0
      %p94 = por %p92, %p93
      %p95 = scmp.ne.s32.totalorder %s83, %s84
      %p96 = scmp.eq.s32.totalorder %s27, 1
      %p97 = por %p95, %p96
      %p99 = scmp.ne.s32.totalorder %s84, %s98
      %p100 = scmp.eq.s32.totalorder %s27, 0
      %p101 = por %p99, %p100
      %s103 = sadd.s32 %s102, 1
      %p106 = scmp.eq.s32.totalorder %s21, 1
      %p107 = scmp.ne.s32.totalorder %s102, %s104
      %p108 = scmp.eq.s32.totalorder %s21, 0
      %p109 = por %p107, %p108
      %p110 = scmp.ne.s32.totalorder %s102, %s104
      %p111 = scmp.eq.s32.totalorder %s26, 1
      %p112 = por %p110, %p111
      %p113 = scmp.ne.s32.totalorder %s104, %s105
      %p114 = scmp.eq.s32.totalorder %s26, 0
      %p115 = por %p113, %p114
      %p116 = scmp.ne.s32.totalorder %s104, %s105
      %p117 = scmp.eq.s32.totalorder %s27, 1
      %p118 = por %p116, %p117
      %p120 = scmp.ne.s32.totalorder %s105, %s119
      %p121 = scmp.eq.s32.totalorder %s27, 0
      %p122 = por %p120, %p121
      %s124 = sadd.s32 %s123, 1
      %p127 = scmp.eq.s32.totalorder %s21, 1
      %p128 = scmp.ne.s32.totalorder %s123, %s125
      %p129 = scmp.eq.s32.totalorder %s21, 0
      %p130 = por %p128, %p129
      %p131 = scmp.ne.s32.totalorder %s123, %s125
      %p132 = scmp.eq.s32.totalorder %s26, 1
      %p133 = por %p131, %p132
      %p134 = scmp.ne.s32.totalorder %s125, %s126
      %p135 = scmp.eq.s32.totalorder %s26, 0
      %p136 = por %p134, %p135
      %p137 = scmp.ne.s32.totalorder %s125, %s126
      %p138 = scmp.eq.s32.totalorder %s27, 1
      %p139 = por %p137, %p138
      %p141 = scmp.ne.s32.totalorder %s126, %s140
      %p142 = scmp.eq.s32.totalorder %s27, 0
      %p143 = por %p141, %p142
      %s145 = sadd.s32 %s144, 1
      %p148 = scmp.eq.s32.totalorder %s21, 1
      %p149 = scmp.ne.s32.totalorder %s144, %s146
      %p150 = scmp.eq.s32.totalorder %s21, 0
      %p151 = por %p149, %p150
      %p152 = scmp.ne.s32.totalorder %s144, %s146
      %p153 = scmp.eq.s32.totalorder %s26, 1
      %p154 = por %p152, %p153
      %p155 = scmp.ne.s32.totalorder %s146, %s147
      %p156 = scmp.eq.s32.totalorder %s26, 0
      %p157 = por %p155, %p156
      %p158 = scmp.ne.s32.totalorder %s146, %s147
      %p159 = scmp.eq.s32.totalorder %s27, 1
      %p160 = por %p158, %p159
      %p162 = scmp.ne.s32.totalorder %s147, %s161
      %p163 = scmp.eq.s32.totalorder %s27, 0
      %p164 = por %p162, %p163
      %s166 = sadd.s32 %s165, 1
      %p169 = scmp.eq.s32.totalorder %s21, 1
      %p170 = scmp.ne.s32.totalorder %s165, %s167
      %p171 = scmp.eq.s32.totalorder %s21, 0
      %p172 = por %p170, %p171
      %p173 = scmp.ne.s32.totalorder %s165, %s167
      %p174 = scmp.eq.s32.totalorder %s26, 1
      %p175 = por %p173, %p174
      %p176 = scmp.ne.s32.totalorder %s167, %s168
      %p177 = scmp.eq.s32.totalorder %s26, 0
      %p178 = por %p176, %p177
      %p179 = scmp.ne.s32.totalorder %s167, %s168
      %p180 = scmp.eq.s32.totalorder %s27, 1
      %p181 = por %p179, %p180
      %p183 = scmp.ne.s32.totalorder %s168, %s182
      %p184 = scmp.eq.s32.totalorder %s27, 0
      %p185 = por %p183, %p184
      %s187 = sadd.s32 %s186, 1
      %p190 = scmp.eq.s32.totalorder %s21, 1
      %p191 = scmp.ne.s32.totalorder %s186, %s188
      %p192 = scmp.eq.s32.totalorder %s21, 0
      %p193 = por %p191, %p192
      %p194 = scmp.ne.s32.totalorder %s186, %s188
      %p195 = scmp.eq.s32.totalorder %s26, 1
      %p196 = por %p194, %p195
      %p197 = scmp.ne.s32.totalorder %s188, %s189
      %p198 = scmp.eq.s32.totalorder %s26, 0
      %p199 = por %p197, %p198
      %p200 = scmp.ne.s32.totalorder %s188, %s189
      %p201 = scmp.eq.s32.totalorder %s27, 1
      %p202 = por %p200, %p201
      %p204 = scmp.ne.s32.totalorder %s189, %s203
      %p205 = scmp.eq.s32.totalorder %s27, 0
      %p206 = por %p204, %p205
      %s208 = sadd.s32 %s207, 1
      %p211 = scmp.eq.s32.totalorder %s21, 1
      %p212 = scmp.ne.s32.totalorder %s207, %s209
      %p213 = scmp.eq.s32.totalorder %s21, 0
      %p214 = por %p212, %p213
      %p215 = scmp.ne.s32.totalorder %s207, %s209
      %p216 = scmp.eq.s32.totalorder %s26, 1
      %p217 = por %p215, %p216
      %p218 = scmp.ne.s32.totalorder %s209, %s210
      %p219 = scmp.eq.s32.totalorder %s26, 0
      %p220 = por %p218, %p219
      %p221 = scmp.ne.s32.totalorder %s209, %s210
      %p222 = scmp.eq.s32.totalorder %s27, 1
      %p223 = por %p221, %p222
      %p225 = scmp.ne.s32.totalorder %s210, %s224
      %p226 = scmp.eq.s32.totalorder %s27, 0
      %p227 = por %p225, %p226
      %s228 = ssub.s32 %s21, %s28
      %p229 = scmp.eq.s32.totalorder %s228, 0
      %s231 = sadd.s32 %s230, 1
      %s232 = scalar_select %p229, %s230, %s231
      %p235 = pneg %p229
      %p236 = scmp.eq.s32.totalorder %s21, 1
      %p237 = por %p235, %p236
      %p238 = scmp.ne.s32.totalorder %s230, %s233
      %p239 = scmp.eq.s32.totalorder %s21, 0
      %p240 = por %p238, %p239
      %p241 = scmp.ne.s32.totalorder %s230, %s233
      %p242 = scmp.eq.s32.totalorder %s26, 1
      %p243 = por %p241, %p242
      %p244 = scmp.ne.s32.totalorder %s233, %s234
      %p245 = scmp.eq.s32.totalorder %s26, 0
      %p246 = por %p244, %p245
      %p247 = scmp.ne.s32.totalorder %s233, %s234
      %p248 = scmp.eq.s32.totalorder %s27, 1
      %p249 = por %p247, %p248
      %p251 = scmp.ne.s32.totalorder %s234, %s250
      %p252 = scmp.eq.s32.totalorder %s27, 0
      %p253 = por %p251, %p252
      %p254 = scmp.le.s32.totalorder 1, %s21
      %p255 = scmp.lt.s32.totalorder %s21, 3
      %p256 = pnand %p254, %p255
      %p257 = pneg %p256
      // Predicated region
      $region9: #{tpu_custom_call.1} parent=5 // pred_check
        _
      $region10: #{tpu_custom_call.1} parent=5 // pred_check_branch
        %259 = sbr.rel (%p256) target = $region12
      $region11: #{tpu_custom_call.1} parent=5 // pred_region
        %s260 = ssub.s32 %s21, 1
        // Predicated region
        $region13: #{tpu_custom_call.1} parent=11 // pred_check
          %p261 = pneg %p94
        $region14: #{tpu_custom_call.1} parent=11 // pred_check_branch
          %263 = sbr.rel (%p261) target = $region16
        $region15: #{tpu_custom_call.1} parent=11 // pred_region
          _
        $region16: #{tpu_custom_call.1} parent=11 // pred_fallthru
          _
        // Predicated region
        $region17: #{tpu_custom_call.1} parent=11 // pred_check
          %p264 = pneg %p115
        $region18: #{tpu_custom_call.1} parent=11 // pred_check_branch
          %266 = sbr.rel (%p264) target = $region20
        $region19: #{tpu_custom_call.1} parent=11 // pred_region
          _
        $region20: #{tpu_custom_call.1} parent=11 // pred_fallthru
          _
        // Predicated region
        $region21: #{tpu_custom_call.1} parent=11 // pred_check
          %p267 = pneg %p136
        $region22: #{tpu_custom_call.1} parent=11 // pred_check_branch
          %269 = sbr.rel (%p267) target = $region24
        $region23: #{tpu_custom_call.1} parent=11 // pred_region
          _
        $region24: #{tpu_custom_call.1} parent=11 // pred_fallthru
          _
        // Predicated region
        $region25: #{tpu_custom_call.1} parent=11 // pred_check
          %p270 = pneg %p157
        $region26: #{tpu_custom_call.1} parent=11 // pred_check_branch
          %272 = sbr.rel (%p270) target = $region28
        $region27: #{tpu_custom_call.1} parent=11 // pred_region
          _
        $region28: #{tpu_custom_call.1} parent=11 // pred_fallthru
          _
        // Predicated region
        $region29: #{tpu_custom_call.1} parent=11 // pred_check
          %p273 = pneg %p178
        $region30: #{tpu_custom_call.1} parent=11 // pred_check_branch
          %275 = sbr.rel (%p273) target = $region32
        $region31: #{tpu_custom_call.1} parent=11 // pred_region
          _
        $region32: #{tpu_custom_call.1} parent=11 // pred_fallthru
          _
        // Predicated region
        $region33: #{tpu_custom_call.1} parent=11 // pred_check
          %p276 = pneg %p199
        $region34: #{tpu_custom_call.1} parent=11 // pred_check_branch
          %278 = sbr.rel (%p276) target = $region36
        $region35: #{tpu_custom_call.1} parent=11 // pred_region
          _
        $region36: #{tpu_custom_call.1} parent=11 // pred_fallthru
          _
        // Predicated region
        $region37: #{tpu_custom_call.1} parent=11 // pred_check
          %p279 = pneg %p220
        $region38: #{tpu_custom_call.1} parent=11 // pred_check_branch
          %281 = sbr.rel (%p279) target = $region40
        $region39: #{tpu_custom_call.1} parent=11 // pred_region
          _
        $region40: #{tpu_custom_call.1} parent=11 // pred_fallthru
          _
      $region12: #{tpu_custom_call.1} parent=5 // pred_fallthru
        _
      %p282 = scmp.lt.s32.totalorder %s21, 2
      // Predicated region
      $region41: #{tpu_custom_call.1} parent=5 // pred_check
        %p283 = pneg %p282
      $region42: #{tpu_custom_call.1} parent=5 // pred_check_branch
        %285 = sbr.rel (%p283) target = $region44
      $region43: #{tpu_custom_call.1} parent=5 // pred_region
        // Predicated region
        $region45: #{tpu_custom_call.1} parent=43 // pred_check
          %p286 = pneg %p41
        $region46: #{tpu_custom_call.1} parent=43 // pred_check_branch
          %288 = sbr.rel (%p286) target = $region48
        $region47: #{tpu_custom_call.1} parent=43 // pred_region
          %s289 = sand.u32 %s31, 1
          %s290 = scalar_lea.sflag [#allocation3], %s289
          %s291 = sand.u32 %s31, 1
          %s292 = smul.addr %s291, 256
          %s293 = scalar_lea.vmem [#allocation2], %s292
          %s294 = smul.u32 8, %s21
          %s296 = ssub.s32 4096, 4096
          %297 = vsyncadd %s290, %s296
          %s298 = smul.addr %s294, 4
          %s299 = smul.addr %s298, 128
          %s300 = scalar_lea.hbm %s0, %s299
          %s301 = sshll.u32 %s293, 4
          %s302 = int_to_ptr.vmem [resolvable:$true] %s301
          %307 = dma.hbm_to_vmem [thread:$0]  %s300, 4096, %s302, %s290, 128, 128, 8
        $region48: #{tpu_custom_call.1} parent=43 // pred_fallthru
          _
        // Predicated region
        $region49: #{tpu_custom_call.1} parent=43 // pred_check
          %p308 = pneg %p67
        $region50: #{tpu_custom_call.1} parent=43 // pred_check_branch
          %310 = sbr.rel (%p308) target = $region52
        $region51: #{tpu_custom_call.1} parent=43 // pred_region
          %p311 = scmp.lt.s32.totalorder %s21, 1
          %s312 = scalar_select %p311, %s21, 1
          %s313 = smul.addr %s312, 8
          %s314 = scalar_lea.vmem %s1, %s313
        $region52: #{tpu_custom_call.1} parent=43 // pred_fallthru
          _
      $region44: #{tpu_custom_call.1} parent=5 // pred_fallthru
        _
      %p315 = scmp.le.s32.totalorder 1, %s21
      %p316 = scmp.lt.s32.totalorder %s21, 3
      %p317 = pnand %p315, %p316
      %p318 = pneg %p317
      // Predicated region
      $region53: #{tpu_custom_call.1} parent=5 // pred_check
        _
      $region54: #{tpu_custom_call.1} parent=5 // pred_check_branch
        %320 = sbr.rel (%p317) target = $region56
      $region55: #{tpu_custom_call.1} parent=5 // pred_region
        %s321 = ssub.s32 %s21, 1
        %s322 = sand.u32 %s34, 1
        %s323 = scalar_lea.sflag [#allocation3], %s322
        %s324 = sand.u32 %s34, 1
        %s325 = smul.addr %s324, 256
        %s326 = scalar_lea.vmem [#allocation2], %s325
        // Predicated region
        $region57: #{tpu_custom_call.1} parent=55 // pred_check
          %p327 = pneg %p47
        $region58: #{tpu_custom_call.1} parent=55 // pred_check_branch
          %329 = sbr.rel (%p327) target = $region60
        $region59: #{tpu_custom_call.1} parent=55 // pred_region
          %330 = dma.done %s323, 4096
        $region60: #{tpu_custom_call.1} parent=55 // pred_fallthru
          _
        %s331 = sand.u32 %s34, 1
        %s332 = scalar_lea.sflag [#allocation3], %s331
        %s333 = sand.u32 %s34, 1
        %s334 = smul.addr %s333, 256
        %s335 = scalar_lea.vmem [#allocation2], %s334
        %p336 = pneg %p47
        %p337 = pneg %p44
        %p338 = scmp.lt.s32.totalorder %s26, 1
        %s339 = scalar_select %p338, %s26, 1
        %s340 = smul.addr %s339, 8
        %s341 = scalar_lea.vmem %s1, %s340
        %p342 = pneg %p73
        %p343 = pneg %p70
        %p344 = pneg %p94
        %p345 = pneg %p91
        %p346 = pneg %p115
        %p347 = pneg %p112
        %p348 = pneg %p136
        %p349 = pneg %p133
        %p350 = pneg %p157
        %p351 = pneg %p154
        %p352 = pneg %p178
        %p353 = pneg %p175
        %p354 = pneg %p199
        %p355 = pneg %p196
        %p356 = pneg %p220
        %p357 = pneg %p217
        %p358 = pneg %p246
        %p359 = pneg %p243
        %s360 = sand.u32 %s233, 1
        %s361 = scalar_lea.sflag [#allocation4], %s360
        %s362 = sand.u32 %s233, 1
        %s363 = smul.addr %s362, 8
        %s364 = scalar_lea.vmem [#allocation5], %s363
        %s365 = smul.u32 8, %s26
        %p366 = scmp.lt.s32.totalorder %s26, 1
        %s367 = scalar_select %p366, %s26, 1
        %s368 = smul.addr %s367, 8
        %s369 = scalar_lea.vmem %s1, %s368
        %v371 = vld [vmem:[%s326] sm:$0xff]
        %v372 = vld [vmem:[%s326 + $0x8] sm:$0xff]
        %v373 = vld [vmem:[%s326 + $0x10] sm:$0xff]
        %v374 = vld [vmem:[%s326 + $0x18] sm:$0xff]
        %v375 = vld [vmem:[%s326 + $0x20] sm:$0xff]
        %v376 = vld [vmem:[%s326 + $0x28] sm:$0xff]
        %v377 = vld [vmem:[%s326 + $0x30] sm:$0xff]
        %v378 = vld [vmem:[%s326 + $0x38] sm:$0xff]
        %v379 = vld [vmem:[%s326 + $0x40] sm:$0xff]
        %v380 = vld [vmem:[%s326 + $0x48] sm:$0xff]
        %v381 = vld [vmem:[%s326 + $0x50] sm:$0xff]
        %v382 = vld [vmem:[%s326 + $0x58] sm:$0xff]
        %v383 = vld [vmem:[%s326 + $0x60] sm:$0xff]
        %v384 = vld [vmem:[%s326 + $0x68] sm:$0xff]
        %v385 = vld [vmem:[%s326 + $0x70] sm:$0xff]
        %v386 = vld [vmem:[%s326 + $0x78] sm:$0xff]
        %v387 = vld [vmem:[%s326 + $0x80] sm:$0xff]
        %v388 = vld [vmem:[%s326 + $0x88] sm:$0xff]
        %v389 = vld [vmem:[%s326 + $0x90] sm:$0xff]
        %v390 = vld [vmem:[%s326 + $0x98] sm:$0xff]
        %v391 = vld [vmem:[%s326 + $0xa0] sm:$0xff]
        %v392 = vld [vmem:[%s326 + $0xa8] sm:$0xff]
        %v393 = vld [vmem:[%s326 + $0xb0] sm:$0xff]
        %v394 = vld [vmem:[%s326 + $0xb8] sm:$0xff]
        %v395 = vld [vmem:[%s326 + $0xc0] sm:$0xff]
        %v396 = vld [vmem:[%s326 + $0xc8] sm:$0xff]
        %v397 = vld [vmem:[%s326 + $0xd0] sm:$0xff]
        %v398 = vld [vmem:[%s326 + $0xd8] sm:$0xff]
        %v399 = vld [vmem:[%s326 + $0xe0] sm:$0xff]
        %v400 = vld [vmem:[%s326 + $0xe8] sm:$0xff]
        %v401 = vld [vmem:[%s326 + $0xf0] sm:$0xff]
        %v402 = vld [vmem:[%s326 + $0xf8] sm:$0xff]
        %vm403 = vcmask 523264
        %v404 = vsel %vm403, %v371, 0.0
        %405 = vadd.xlane.f32.xlu0 %v404
        %v406 = vpop.xlane.xlu0 %405
        %v407 = vsel %vm403, %v372, 0.0
        %408 = vadd.xlane.f32.xlu0 %v407
        %v409 = vpop.xlane.xlu0 %408
        %v410 = vsel %vm403, %v373, 0.0
        %411 = vadd.xlane.f32.xlu0 %v410
        %v412 = vpop.xlane.xlu0 %411
        %v413 = vsel %vm403, %v374, 0.0
        %414 = vadd.xlane.f32.xlu0 %v413
        %v415 = vpop.xlane.xlu0 %414
        %v416 = vsel %vm403, %v375, 0.0
        %417 = vadd.xlane.f32.xlu0 %v416
        %v418 = vpop.xlane.xlu0 %417
        %v419 = vsel %vm403, %v376, 0.0
        %420 = vadd.xlane.f32.xlu0 %v419
        %v421 = vpop.xlane.xlu0 %420
        %v422 = vsel %vm403, %v377, 0.0
        %423 = vadd.xlane.f32.xlu0 %v422
        %v424 = vpop.xlane.xlu0 %423
        %v425 = vsel %vm403, %v378, 0.0
        %426 = vadd.xlane.f32.xlu0 %v425
        %v427 = vpop.xlane.xlu0 %426
        %v428 = vsel %vm403, %v379, 0.0
        %429 = vadd.xlane.f32.xlu0 %v428
        %v430 = vpop.xlane.xlu0 %429
        %v431 = vsel %vm403, %v380, 0.0
        %432 = vadd.xlane.f32.xlu0 %v431
        %v433 = vpop.xlane.xlu0 %432
        %v434 = vsel %vm403, %v381, 0.0
        %435 = vadd.xlane.f32.xlu0 %v434
        %v436 = vpop.xlane.xlu0 %435
        %v437 = vsel %vm403, %v382, 0.0
        %438 = vadd.xlane.f32.xlu0 %v437
        %v439 = vpop.xlane.xlu0 %438
        %v440 = vsel %vm403, %v383, 0.0
        %441 = vadd.xlane.f32.xlu0 %v440
        %v442 = vpop.xlane.xlu0 %441
        %v443 = vsel %vm403, %v384, 0.0
        %444 = vadd.xlane.f32.xlu0 %v443
        %v445 = vpop.xlane.xlu0 %444
        %v446 = vsel %vm403, %v385, 0.0
        %447 = vadd.xlane.f32.xlu0 %v446
        %v448 = vpop.xlane.xlu0 %447
        %v449 = vsel %vm403, %v386, 0.0
        %450 = vadd.xlane.f32.xlu0 %v449
        %v451 = vpop.xlane.xlu0 %450
        %v452 = vsel %vm403, %v387, 0.0
        %453 = vadd.xlane.f32.xlu0 %v452
        %v454 = vpop.xlane.xlu0 %453
        %v455 = vsel %vm403, %v388, 0.0
        %456 = vadd.xlane.f32.xlu0 %v455
        %v457 = vpop.xlane.xlu0 %456
        %v458 = vsel %vm403, %v389, 0.0
        %459 = vadd.xlane.f32.xlu0 %v458
        %v460 = vpop.xlane.xlu0 %459
        %v461 = vsel %vm403, %v390, 0.0
        %462 = vadd.xlane.f32.xlu0 %v461
        %v463 = vpop.xlane.xlu0 %462
        %v464 = vsel %vm403, %v391, 0.0
        %465 = vadd.xlane.f32.xlu0 %v464
        %v466 = vpop.xlane.xlu0 %465
        %v467 = vsel %vm403, %v392, 0.0
        %468 = vadd.xlane.f32.xlu0 %v467
        %v469 = vpop.xlane.xlu0 %468
        %v470 = vsel %vm403, %v393, 0.0
        %471 = vadd.xlane.f32.xlu0 %v470
        %v472 = vpop.xlane.xlu0 %471
        %v473 = vsel %vm403, %v394, 0.0
        %474 = vadd.xlane.f32.xlu0 %v473
        %v475 = vpop.xlane.xlu0 %474
        %v476 = vsel %vm403, %v395, 0.0
        %477 = vadd.xlane.f32.xlu0 %v476
        %v478 = vpop.xlane.xlu0 %477
        %v479 = vsel %vm403, %v396, 0.0
        %480 = vadd.xlane.f32.xlu0 %v479
        %v481 = vpop.xlane.xlu0 %480
        %v482 = vsel %vm403, %v397, 0.0
        %483 = vadd.xlane.f32.xlu0 %v482
        %v484 = vpop.xlane.xlu0 %483
        %v485 = vsel %vm403, %v398, 0.0
        %486 = vadd.xlane.f32.xlu0 %v485
        %v487 = vpop.xlane.xlu0 %486
        %v488 = vsel %vm403, %v399, 0.0
        %489 = vadd.xlane.f32.xlu0 %v488
        %v490 = vpop.xlane.xlu0 %489
        %v491 = vsel %vm403, %v400, 0.0
        %492 = vadd.xlane.f32.xlu0 %v491
        %v493 = vpop.xlane.xlu0 %492
        %v494 = vsel %vm403, %v401, 0.0
        %495 = vadd.xlane.f32.xlu0 %v494
        %v496 = vpop.xlane.xlu0 %495
        %v497 = vsel %vm403, %v402, 0.0
        %498 = vadd.xlane.f32.xlu0 %v497
        %v499 = vpop.xlane.xlu0 %498
        %v500 = vld [vmem:[%s369] sm:$0xff]
        %v501 = vpack.c.bf16 %v500, %v500
        %v502 = vld [vmem:[%s2] sm:$0xf]
        %v503 = vld [vmem:[%s3] sm:$0x1]
        %v505 = vlaneseq
        %v506 = vshrl.u32 %v505, 7
        %v507 = vsub.s32 0, %v506
        %v508 = vrot.slane %v503, %v507
        %vm510 = vcmask 64512
        %v512 = vsel %vm510, %v501, 0
        %vm514 = vcmask 1043456
        %v516 = vsel %vm514, %v502, 0
        %518 = vmatprep.subr.bf16.mxu0 0
        %519 = vmatpush1.bf16.msra.mxu0 0
        %520 = vmatprep.subr.bf16.mxu0 0
        %521 = vmatpush1.bf16.msra.mxu0 0
        %522 = vmatprep.subr.bf16.mxu0 0
        %523 = vmatpush1.bf16.msra.mxu0 0
        %524 = vmatprep.subr.bf16.mxu0 0
        %525 = vmatpush1.bf16.msra.mxu0 0
        %526 = vmatprep.subr.bf16.mxu0 0
        %527 = vmatpush1.bf16.msra.mxu0 0
        %528 = vmatprep.subr.bf16.mxu0 0
        %529 = vmatpush1.bf16.msra.mxu0 0
        %530 = vmatprep.subr.bf16.mxu0 0
        %531 = vmatpush1.bf16.msra.mxu0 0
        %532 = vmatprep.subr.bf16.mxu0 0
        %533 = vmatpush1.bf16.msra.mxu0 %v516
        %534 = vmatprep.subr.bf16.mxu0 0
        %535 = vmatpush2.bf16.msra.mxu0 0
        %536 = vmatprep.subr.bf16.mxu0 0
        %537 = vmatpush2.bf16.msra.mxu0 0
        %538 = vmatprep.subr.bf16.mxu0 0
        %539 = vmatpush2.bf16.msra.mxu0 0
        %540 = vmatprep.subr.bf16.mxu0 0
        %541 = vmatpush2.bf16.msra.mxu0 0
        %542 = vmatprep.subr.bf16.mxu0 0
        %543 = vmatpush2.bf16.msra.mxu0 0
        %544 = vmatprep.subr.bf16.mxu0 0
        %545 = vmatpush2.bf16.msra.mxu0 0
        %546 = vmatprep.subr.bf16.mxu0 0
        %547 = vmatpush2.bf16.msra.mxu0 0
        %548 = vmatprep.subr.bf16.mxu0 0
        %549 = vmatpush2.bf16.msra.mxu0 0
        %550 = vmatprep.mubr.bf16.mxu0 0
        %551 = vmatmul.mubr.bf16.gmra.mxu0 %v512
        %v552 = vpop.f32.mrf.mxu0
        %v553 = vadd.f32 %v508, %v552
        %v554 = vpop.f32.mrf.mxu0
        %v555 = vpop.f32.mrf.mxu0
        %v556 = vpop.f32.mrf.mxu0
        %557 = vdwg.mxu0
        %v558 = vxor.u32 %v553, 2147483648
        %v559 = vmul.f32 %v558, 1.442695
        %v560 = vpow.pop %v559
        %v561 = vadd.f32 %v560, 1.0
        %v562 = vrcp.pop %v561
        %v563 = vmul.f32 1.0, %v562
        %v564 = vmul.f32 %v553, %v563
        %v565 = vpack.c.bf16 %v564, %v564
        %v566 = vld [vmem:[%s4] sm:$0xf]
        %v567 = vld [vmem:[%s4 + $0x4] sm:$0xf]
        %v568 = vld [vmem:[%s4 + $0x8] sm:$0xf]
        %v569 = vld [vmem:[%s4 + $0xc] sm:$0xf]
        %v570 = vld [vmem:[%s5] sm:$0x1]
        %v572 = vlaneseq
        %v573 = vshrl.u32 %v572, 7
        %v574 = vsub.s32 0, %v573
        %v575 = vrot.slane %v570, %v574
        %v581 = vunpack.c.l.b16 %v566
        %v582 = vunpack.c.l.b16 %v567
        %v583 = vunpack.c.l.b16 %v568
        %v584 = vunpack.c.l.b16 %v569
        %v585 = vpack.c.b16 %v582, %v581
        %v586 = vpack.c.b16 %v584, %v583
        %vm589 = vcmask 261120
        %v591 = vsel %vm589, %v565, 0
        %593 = vmatprep.subr.bf16.mxu0 0
        %594 = vmatpush1.bf16.msra.mxu0 0
        %595 = vmatprep.subr.bf16.mxu0 0
        %596 = vmatpush1.bf16.msra.mxu0 0
        %597 = vmatprep.subr.bf16.mxu0 0
        %598 = vmatpush1.bf16.msra.mxu0 0
        %599 = vmatprep.subr.bf16.mxu0 0
        %600 = vmatpush1.bf16.msra.mxu0 0
        %601 = vmatprep.subr.bf16.mxu0 0
        %602 = vmatpush1.bf16.msra.mxu0 0
        %603 = vmatprep.subr.bf16.mxu0 0
        %604 = vmatpush1.bf16.msra.mxu0 0
        %605 = vmatprep.subr.bf16.mxu0 0
        %606 = vmatpush1.bf16.msra.mxu0 %v586
        %607 = vmatprep.subr.bf16.mxu0 0
        %608 = vmatpush1.bf16.msra.mxu0 %v585
        %609 = vmatprep.subr.bf16.mxu0 0
        %610 = vmatpush2.bf16.msra.mxu0 0
        %611 = vmatprep.subr.bf16.mxu0 0
        %612 = vmatpush2.bf16.msra.mxu0 0
        %613 = vmatprep.subr.bf16.mxu0 0
        %614 = vmatpush2.bf16.msra.mxu0 0
        %615 = vmatprep.subr.bf16.mxu0 0
        %616 = vmatpush2.bf16.msra.mxu0 0
        %617 = vmatprep.subr.bf16.mxu0 0
        %618 = vmatpush2.bf16.msra.mxu0 0
        %619 = vmatprep.subr.bf16.mxu0 0
        %620 = vmatpush2.bf16.msra.mxu0 0
        %621 = vmatprep.subr.bf16.mxu0 0
        %622 = vmatpush2.bf16.msra.mxu0 0
        %623 = vmatprep.subr.bf16.mxu0 0
        %624 = vmatpush2.bf16.msra.mxu0 0
        %625 = vmatprep.mubr.bf16.mxu0 0
        %626 = vmatmul.mubr.bf16.gmra.mxu0 %v591
        %v627 = vpop.f32.mrf.mxu0
        %v628 = vadd.f32 %v575, %v627
        %v629 = vpop.f32.mrf.mxu0
        %v630 = vpop.f32.mrf.mxu0
        %v631 = vpop.f32.mrf.mxu0
        %632 = vdwg.mxu0
        %v633 = vxor.u32 %v628, 2147483648
        %v634 = vmul.f32 %v633, 1.442695
        %v635 = vpow.pop %v634
        %v636 = vadd.f32 %v635, 1.0
        %v637 = vrcp.pop %v636
        %v638 = vmul.f32 1.0, %v637
        %v639 = vmul.f32 %v628, %v638
        %v640 = vpack.c.bf16 %v409, %v406
        %v641 = vpack.c.bf16 %v415, %v412
        %v642 = vpack.c.bf16 %v421, %v418
        %v643 = vpack.c.bf16 %v427, %v424
        %v644 = vpack.c.bf16 %v433, %v430
        %v645 = vpack.c.bf16 %v439, %v436
        %v646 = vpack.c.bf16 %v445, %v442
        %v647 = vpack.c.bf16 %v451, %v448
        %v648 = vpack.c.bf16 %v457, %v454
        %v649 = vpack.c.bf16 %v463, %v460
        %v650 = vpack.c.bf16 %v469, %v466
        %v651 = vpack.c.bf16 %v475, %v472
        %v652 = vpack.c.bf16 %v481, %v478
        %v653 = vpack.c.bf16 %v487, %v484
        %v654 = vpack.c.bf16 %v493, %v490
        %v655 = vpack.c.bf16 %v499, %v496
        %v656 = vld [vmem:[%s6] sm:$0xf]
        %v657 = vld [vmem:[%s6 + $0x4] sm:$0xf]
        %v658 = vld [vmem:[%s6 + $0x8] sm:$0xf]
        %v659 = vld [vmem:[%s6 + $0xc] sm:$0xf]
        %v660 = vpack.c.bf16 %v639, %v639
        %v661 = vld [vmem:[%s7] sm:$0xf]
        %v662 = vld [vmem:[%s7 + $0x4] sm:$0xf]
        %v665 = vunpack.c.l.b16 %v661
        %v666 = vunpack.c.l.b16 %v662
        %v667 = vpack.c.b16 %v666, %v665
        %vm669 = vcmask 130048
        %v671 = vsel %vm669, %v660, 0
        %673 = vmatprep.subr.bf16.mxu0 0
        %674 = vmatpush1.bf16.msra.mxu0 0
        %675 = vmatprep.subr.bf16.mxu0 0
        %676 = vmatpush1.bf16.msra.mxu0 0
        %677 = vmatprep.subr.bf16.mxu0 0
        %678 = vmatpush1.bf16.msra.mxu0 0
        %679 = vmatprep.subr.bf16.mxu0 0
        %680 = vmatpush1.bf16.msra.mxu0 0
        %681 = vmatprep.subr.bf16.mxu0 0
        %682 = vmatpush1.bf16.msra.mxu0 0
        %683 = vmatprep.subr.bf16.mxu0 0
        %684 = vmatpush1.bf16.msra.mxu0 0
        %685 = vmatprep.subr.bf16.mxu0 0
        %686 = vmatpush1.bf16.msra.mxu0 0
        %687 = vmatprep.subr.bf16.mxu0 0
        %688 = vmatpush1.bf16.msra.mxu0 %v667
        %689 = vmatprep.subr.bf16.mxu0 0
        %690 = vmatpush2.bf16.msra.mxu0 0
        %691 = vmatprep.subr.bf16.mxu0 0
        %692 = vmatpush2.bf16.msra.mxu0 0
        %693 = vmatprep.subr.bf16.mxu0 0
        %694 = vmatpush2.bf16.msra.mxu0 0
        %695 = vmatprep.subr.bf16.mxu0 0
        %696 = vmatpush2.bf16.msra.mxu0 0
        %697 = vmatprep.subr.bf16.mxu0 0
        %698 = vmatpush2.bf16.msra.mxu0 0
        %699 = vmatprep.subr.bf16.mxu0 0
        %700 = vmatpush2.bf16.msra.mxu0 0
        %701 = vmatprep.subr.bf16.mxu0 0
        %702 = vmatpush2.bf16.msra.mxu0 0
        %703 = vmatprep.subr.bf16.mxu0 0
        %704 = vmatpush2.bf16.msra.mxu0 0
        %705 = vmatprep.mubr.bf16.mxu0 0
        %706 = vmatmul.mubr.bf16.gmra.mxu0 %v671
        %v707 = vpop.f32.mrf.mxu0
        %v708 = vadd.f32 0.0, %v707
        %v709 = vpop.f32.mrf.mxu0
        %v710 = vpop.f32.mrf.mxu0
        %v711 = vpop.f32.mrf.mxu0
        %712 = vdwg.mxu0
        %v729 = vunpack.c.l.b16 %v640
        %v730 = vunpack.c.h.b16 %v640
        %v731 = vunpack.c.l.b16 %v641
        %v732 = vunpack.c.h.b16 %v641
        %v733 = vunpack.c.l.b16 %v642
        %v734 = vunpack.c.h.b16 %v642
        %v735 = vunpack.c.l.b16 %v643
        %v736 = vunpack.c.h.b16 %v643
        %v737 = vunpack.c.l.b16 %v644
        %v738 = vunpack.c.h.b16 %v644
        %v739 = vunpack.c.l.b16 %v645
        %v740 = vunpack.c.h.b16 %v645
        %v741 = vunpack.c.l.b16 %v646
        %v742 = vunpack.c.h.b16 %v646
        %v743 = vunpack.c.l.b16 %v647
        %v744 = vunpack.c.h.b16 %v647
        %v745 = vunpack.c.l.b16 %v648
        %v746 = vunpack.c.h.b16 %v648
        %v747 = vunpack.c.l.b16 %v649
        %v748 = vunpack.c.h.b16 %v649
        %v749 = vunpack.c.l.b16 %v650
        %v750 = vunpack.c.h.b16 %v650
        %v751 = vunpack.c.l.b16 %v651
        %v752 = vunpack.c.h.b16 %v651
        %v753 = vunpack.c.l.b16 %v652
        %v754 = vunpack.c.h.b16 %v652
        %v755 = vunpack.c.l.b16 %v653
        %v756 = vunpack.c.h.b16 %v653
        %v757 = vunpack.c.l.b16 %v654
        %v758 = vunpack.c.h.b16 %v654
        %v759 = vunpack.c.l.b16 %v655
        %v760 = vunpack.c.h.b16 %v655
        %v761 = vlaneseq
        %v762 = vand.u32 %v761, 127
        %v763 = vlaneseq
        %v764 = vshrl.u32 %v763, 7
        %v765 = vsub.s32 %v762, %v764
        %v766 = vrot.slane %v729, %v765
        %v767 = vadd.s32 %v762, 4294967288
        %v768 = vlaneseq
        %v769 = vshrl.u32 %v768, 7
        %v770 = vsub.s32 %v767, %v769
        %v771 = vrot.slane %v730, %v770
        %vm772 = vcmask 130112
        %v773 = vsel %vm772, %v771, %v766
        %v774 = vadd.s32 %v762, 4294967280
        %v775 = vlaneseq
        %v776 = vshrl.u32 %v775, 7
        %v777 = vsub.s32 %v774, %v776
        %v778 = vrot.slane %v731, %v777
        %vm779 = vcmask 195712
        %v780 = vsel %vm779, %v778, %v773
        %v781 = vadd.s32 %v762, 4294967272
        %v782 = vlaneseq
        %v783 = vshrl.u32 %v782, 7
        %v784 = vsub.s32 %v781, %v783
        %v785 = vrot.slane %v732, %v784
        %vm786 = vcmask 261312
        %v787 = vsel %vm786, %v785, %v780
        %v788 = vlaneseq
        %v789 = vshrl.u32 %v788, 7
        %v790 = vsub.s32 %v762, %v789
        %v791 = vrot.slane %v733, %v790
        %v792 = vlaneseq
        %v793 = vshrl.u32 %v792, 7
        %v794 = vsub.s32 %v767, %v793
        %v795 = vrot.slane %v734, %v794
        %v796 = vsel %vm772, %v795, %v791
        %v797 = vlaneseq
        %v798 = vshrl.u32 %v797, 7
        %v799 = vsub.s32 %v774, %v798
        %v800 = vrot.slane %v735, %v799
        %v801 = vsel %vm779, %v800, %v796
        %v802 = vlaneseq
        %v803 = vshrl.u32 %v802, 7
        %v804 = vsub.s32 %v781, %v803
        %v805 = vrot.slane %v736, %v804
        %v806 = vsel %vm786, %v805, %v801
        %v807 = vlaneseq
        %v808 = vshrl.u32 %v807, 7
        %v809 = vsub.s32 %v762, %v808
        %v810 = vrot.slane %v737, %v809
        %v811 = vlaneseq
        %v812 = vshrl.u32 %v811, 7
        %v813 = vsub.s32 %v767, %v812
        %v814 = vrot.slane %v738, %v813
        %v815 = vsel %vm772, %v814, %v810
        %v816 = vlaneseq
        %v817 = vshrl.u32 %v816, 7
        %v818 = vsub.s32 %v774, %v817
        %v819 = vrot.slane %v739, %v818
        %v820 = vsel %vm779, %v819, %v815
        %v821 = vlaneseq
        %v822 = vshrl.u32 %v821, 7
        %v823 = vsub.s32 %v781, %v822
        %v824 = vrot.slane %v740, %v823
        %v825 = vsel %vm786, %v824, %v820
        %v826 = vlaneseq
        %v827 = vshrl.u32 %v826, 7
        %v828 = vsub.s32 %v762, %v827
        %v829 = vrot.slane %v741, %v828
        %v830 = vlaneseq
        %v831 = vshrl.u32 %v830, 7
        %v832 = vsub.s32 %v767, %v831
        %v833 = vrot.slane %v742, %v832
        %v834 = vsel %vm772, %v833, %v829
        %v835 = vlaneseq
        %v836 = vshrl.u32 %v835, 7
        %v837 = vsub.s32 %v774, %v836
        %v838 = vrot.slane %v743, %v837
        %v839 = vsel %vm779, %v838, %v834
        %v840 = vlaneseq
        %v841 = vshrl.u32 %v840, 7
        %v842 = vsub.s32 %v781, %v841
        %v843 = vrot.slane %v744, %v842
        %v844 = vsel %vm786, %v843, %v839
        %v845 = vlaneseq
        %v846 = vshrl.u32 %v845, 7
        %v847 = vsub.s32 %v762, %v846
        %v848 = vrot.slane %v745, %v847
        %v849 = vlaneseq
        %v850 = vshrl.u32 %v849, 7
        %v851 = vsub.s32 %v767, %v850
        %v852 = vrot.slane %v746, %v851
        %v853 = vsel %vm772, %v852, %v848
        %v854 = vlaneseq
        %v855 = vshrl.u32 %v854, 7
        %v856 = vsub.s32 %v774, %v855
        %v857 = vrot.slane %v747, %v856
        %v858 = vsel %vm779, %v857, %v853
        %v859 = vlaneseq
        %v860 = vshrl.u32 %v859, 7
        %v861 = vsub.s32 %v781, %v860
        %v862 = vrot.slane %v748, %v861
        %v863 = vsel %vm786, %v862, %v858
        %v864 = vlaneseq
        %v865 = vshrl.u32 %v864, 7
        %v866 = vsub.s32 %v762, %v865
        %v867 = vrot.slane %v749, %v866
        %v868 = vlaneseq
        %v869 = vshrl.u32 %v868, 7
        %v870 = vsub.s32 %v767, %v869
        %v871 = vrot.slane %v750, %v870
        %v872 = vsel %vm772, %v871, %v867
        %v873 = vlaneseq
        %v874 = vshrl.u32 %v873, 7
        %v875 = vsub.s32 %v774, %v874
        %v876 = vrot.slane %v751, %v875
        %v877 = vsel %vm779, %v876, %v872
        %v878 = vlaneseq
        %v879 = vshrl.u32 %v878, 7
        %v880 = vsub.s32 %v781, %v879
        %v881 = vrot.slane %v752, %v880
        %v882 = vsel %vm786, %v881, %v877
        %v883 = vlaneseq
        %v884 = vshrl.u32 %v883, 7
        %v885 = vsub.s32 %v762, %v884
        %v886 = vrot.slane %v753, %v885
        %v887 = vlaneseq
        %v888 = vshrl.u32 %v887, 7
        %v889 = vsub.s32 %v767, %v888
        %v890 = vrot.slane %v754, %v889
        %v891 = vsel %vm772, %v890, %v886
        %v892 = vlaneseq
        %v893 = vshrl.u32 %v892, 7
        %v894 = vsub.s32 %v774, %v893
        %v895 = vrot.slane %v755, %v894
        %v896 = vsel %vm779, %v895, %v891
        %v897 = vlaneseq
        %v898 = vshrl.u32 %v897, 7
        %v899 = vsub.s32 %v781, %v898
        %v900 = vrot.slane %v756, %v899
        %v901 = vsel %vm786, %v900, %v896
        %v902 = vlaneseq
        %v903 = vshrl.u32 %v902, 7
        %v904 = vsub.s32 %v762, %v903
        %v905 = vrot.slane %v757, %v904
        %v906 = vlaneseq
        %v907 = vshrl.u32 %v906, 7
        %v908 = vsub.s32 %v767, %v907
        %v909 = vrot.slane %v758, %v908
        %v910 = vsel %vm772, %v909, %v905
        %v911 = vlaneseq
        %v912 = vshrl.u32 %v911, 7
        %v913 = vsub.s32 %v774, %v912
        %v914 = vrot.slane %v759, %v913
        %v915 = vsel %vm779, %v914, %v910
        %v916 = vlaneseq
        %v917 = vshrl.u32 %v916, 7
        %v918 = vsub.s32 %v781, %v917
        %v919 = vrot.slane %v760, %v918
        %v920 = vsel %vm786, %v919, %v915
        %vm921 = vcmask 1041409
        %v922 = vsel %vm921, %v806, %v787
        %vm923 = vcmask 1042434
        %v924 = vsel %vm923, %v825, %v922
        %vm925 = vcmask 1043459
        %v926 = vsel %vm925, %v844, %v924
        %vm927 = vcmask 1044484
        %v928 = vsel %vm927, %v863, %v926
        %vm929 = vcmask 1045509
        %v930 = vsel %vm929, %v882, %v928
        %vm931 = vcmask 1046534
        %v932 = vsel %vm931, %v901, %v930
        %vm933 = vcmask 1047559
        %v934 = vsel %vm933, %v920, %v932
        %v935 = vpack.c.b16 %v934, %v934
        %v940 = vunpack.c.l.b16 %v656
        %v941 = vunpack.c.l.b16 %v657
        %v942 = vunpack.c.l.b16 %v658
        %v943 = vunpack.c.l.b16 %v659
        %v944 = vpack.c.b16 %v941, %v940
        %v945 = vpack.c.b16 %v943, %v942
        %v949 = vsel %vm589, %v935, 0
        %951 = vmatprep.subr.bf16.mxu0 0
        %952 = vmatpush1.bf16.msra.mxu0 0
        %953 = vmatprep.subr.bf16.mxu0 0
        %954 = vmatpush1.bf16.msra.mxu0 0
        %955 = vmatprep.subr.bf16.mxu0 0
        %956 = vmatpush1.bf16.msra.mxu0 0
        %957 = vmatprep.subr.bf16.mxu0 0
        %958 = vmatpush1.bf16.msra.mxu0 0
        %959 = vmatprep.subr.bf16.mxu0 0
        %960 = vmatpush1.bf16.msra.mxu0 0
        %961 = vmatprep.subr.bf16.mxu0 0
        %962 = vmatpush1.bf16.msra.mxu0 0
        %963 = vmatprep.subr.bf16.mxu0 0
        %964 = vmatpush1.bf16.msra.mxu0 %v945
        %965 = vmatprep.subr.bf16.mxu0 0
        %966 = vmatpush1.bf16.msra.mxu0 %v944
        %967 = vmatprep.subr.bf16.mxu0 0
        %968 = vmatpush2.bf16.msra.mxu0 0
        %969 = vmatprep.subr.bf16.mxu0 0
        %970 = vmatpush2.bf16.msra.mxu0 0
        %971 = vmatprep.subr.bf16.mxu0 0
        %972 = vmatpush2.bf16.msra.mxu0 0
        %973 = vmatprep.subr.bf16.mxu0 0
        %974 = vmatpush2.bf16.msra.mxu0 0
        %975 = vmatprep.subr.bf16.mxu0 0
        %976 = vmatpush2.bf16.msra.mxu0 0
        %977 = vmatprep.subr.bf16.mxu0 0
        %978 = vmatpush2.bf16.msra.mxu0 0
        %979 = vmatprep.subr.bf16.mxu0 0
        %980 = vmatpush2.bf16.msra.mxu0 0
        %981 = vmatprep.subr.bf16.mxu0 0
        %982 = vmatpush2.bf16.msra.mxu0 0
        %983 = vmatprep.mubr.bf16.mxu0 0
        %984 = vmatmul.mubr.bf16.gmra.mxu0 %v949
        %v985 = vpop.f32.mrf.mxu0
        %v986 = vadd.f32 %v708, %v985
        %v987 = vpop.f32.mrf.mxu0
        %v988 = vpop.f32.mrf.mxu0
        %v989 = vpop.f32.mrf.mxu0
        %990 = vdwg.mxu0
        %v991 = vld [vmem:[%s8] sm:$0x1]
        %v993 = vlaneseq
        %v994 = vshrl.u32 %v993, 7
        %v995 = vsub.s32 0, %v994
        %v996 = vrot.slane %v991, %v995
        %v998 = vadd.f32 %v986, %v996
        %999 = vst [vmem:[%s364] sm:$0xff] %v998
        %s1000 = sand.u32 %s233, 1
        %s1001 = scalar_lea.sflag [#allocation4], %s1000
        %s1002 = sand.u32 %s233, 1
        %s1003 = smul.addr %s1002, 8
        %s1004 = scalar_lea.vmem [#allocation5], %s1003
        // Predicated region
        $region61: #{tpu_custom_call.1} parent=55 // pred_check
          %p1005 = pneg %p243
        $region62: #{tpu_custom_call.1} parent=55 // pred_check_branch
          %1007 = sbr.rel (%p1005) target = $region64
        $region63: #{tpu_custom_call.1} parent=55 // pred_region
          %s1009 = ssub.s32 128, 128
          %1010 = vsyncadd %s1001, %s1009
          %s1011 = smul.addr %s26, 128
          %s1012 = scalar_lea.hbm %s9, %s1011
          %s1014 = sshll.u32 %s1004, 4
          %s1015 = int_to_ptr.vmem [resolvable:$true] %s1014
          %1017 = dma.vmem_to_hbm [thread:$0]  %s1015, 128, %s1012, %s1001
        $region64: #{tpu_custom_call.1} parent=55 // pred_fallthru
          _
      $region56: #{tpu_custom_call.1} parent=5 // pred_fallthru
        _
      %p1018 = scmp.le.s32.totalorder 2, %s21
      // Predicated region
      $region65: #{tpu_custom_call.1} parent=5 // pred_check
        %p1019 = pneg %p1018
      $region66: #{tpu_custom_call.1} parent=5 // pred_check_branch
        %1021 = sbr.rel (%p1019) target = $region68
      $region67: #{tpu_custom_call.1} parent=5 // pred_region
        %s1022 = ssub.s32 %s21, 2
        // Predicated region
        $region69: #{tpu_custom_call.1} parent=67 // pred_check
          %p1023 = pneg %p249
        $region70: #{tpu_custom_call.1} parent=67 // pred_check_branch
          %1025 = sbr.rel (%p1023) target = $region72
        $region71: #{tpu_custom_call.1} parent=67 // pred_region
          %s1026 = sand.u32 %s234, 1
          %s1027 = scalar_lea.sflag [#allocation4], %s1026
          %s1028 = sand.u32 %s234, 1
          %s1029 = smul.addr %s1028, 8
          %s1030 = scalar_lea.vmem [#allocation5], %s1029
          %1031 = dma.done %s1027, 128
        $region72: #{tpu_custom_call.1} parent=67 // pred_fallthru
          _
      $region68: #{tpu_custom_call.1} parent=5 // pred_fallthru
        _
    $region6: #{tpu_custom_call.1} parent=1 // loop_footer
      %s25 = sadd.s32 1, %s21
    $region7: #{tpu_custom_call.1} parent=1 // loop_footer_branch
      %20 = sbr.rel target = $region3
    $region8: #{tpu_custom_call.1} parent=1 // loop_exit
      _
    %1032 = vsyncpa [#allocation3], 1
    %s1033 = scalar_lea.sflag [#allocation3], 1
    %1034 = vsyncpa %s1033, 1
    %1035 = vsyncpa [#allocation4], 1
    %s1036 = scalar_lea.sflag [#allocation4], 1
    %1037 = vsyncpa %s1036, 1

</llo_original>
